<compile_context>
chip_gen: v7x
topology: tpu7x:2x2x1
jax: 0.10.0
libtpu: 0.0.40
codegen_flags: <defaults>
</compile_context>

<pallas_src>
import jax
import jax.numpy as jnp
from jax.experimental import pallas as pl
from jax.experimental.pallas import tpu as pltpu


def _round_up(x, m):
    return ((x + m - 1) // m) * m


def _tpu_vmem_and_cores():
    """Return (per-core VMEM bytes, TensorCores per chip) with a safe fallback."""
    try:
        info = pltpu.get_tpu_info()
        vmem = int(info.vmem_capacity_bytes)
    except Exception:
        vmem = 64 * 1024 * 1024  # conservative: v7x-sized VMEM
    # v7x is the only generation with 64 MiB/TC and the only one with 2 TCs.
    cores = 2 if vmem <= 64 * 1024 * 1024 else 1
    return vmem, cores


def _pick_nk_tiles(N, K, vmem_bytes, num_cores):
    """Pick (tn, tk) from the weight shapes + chip generation."""
    if vmem_bytes <= 64 * 1024 * 1024:       # v7x-class
        tn, tk = 512, 1024
    else:                                     # v5e/v6e-class (128 MiB VMEM)
        tn, tk = 1024, 1024
    tn = min(tn, _round_up(N, 128))
    tk = min(tk, _round_up(K, 128))
    if num_cores > 1:
        # Keep >= 2 output blocks along N so small-M (decode) shapes still
        # shard over both TensorCores via the "parallel" j axis.
        while _round_up(N, tn) // tn < num_cores and tn > 128:
            tn = max(128, _round_up(tn // 2, 128))
    return tn, tk


# --------------------------------------------------------------------------
# Kernel
# --------------------------------------------------------------------------
def swiglu_kernel(x_ref, w_ref, b_ref, o_ref, acc_ref):
    k = pl.program_id(2)

    # Single fused dot: (tm, tk) @ (tk, 2*tn) -> (tm, 2*tn), f32 accumulate.
    prod = jnp.dot(x_ref[...], w_ref[...], preferred_element_type=jnp.float32)

    @pl.when(k == 0)
    def _first():
        acc_ref[...] = prod            # direct store: no zero-init round trip

    @pl.when(k > 0)
    def _accum():
        acc_ref[...] += prod

    @pl.when(k == pl.num_programs(2) - 1)
    def _finalize():
        tn = o_ref.shape[-1]
        acc = acc_ref[...] + b_ref[...]          # f32 bias add, broadcast (1, 2*tn)
        g = acc[:, :tn]                          # gate half
        xf = acc[:, tn:]                         # xform half
        o_ref[...] = (g * jax.nn.sigmoid(g) * xf).astype(o_ref.dtype)


# --------------------------------------------------------------------------
# Parameter setup (done ONCE): pad + cast + fuse the two Linear layers.
# --------------------------------------------------------------------------
def prepare_swiglu(w_gate, b_gate, w_xform, b_xform, *, compute_dtype=jnp.bfloat16):
    """w_*: (K, N) = PyTorch nn.Linear.weight.T ; b_*: (N,).

    Returns a params dict holding the fused bf16 weights [Wg|Wx] interleaved
    per N-tile, f32 biases, and the generation-tuned tile sizes.
    """
    K, N = w_gate.shape
    vmem, cores = _tpu_vmem_and_cores()
    tn, tk = _pick_nk_tiles(N, K, vmem, cores)
    tm_default = 512 if vmem <= 64 * 1024 * 1024 else 1024

    Np, Kp = _round_up(N, tn), _round_up(K, tk)
    nb = Np // tn
    cd = compute_dtype

    wg = jnp.pad(w_gate.astype(cd), ((0, Kp - K), (0, Np - N)))
    wx = jnp.pad(w_xform.astype(cd), ((0, Kp - K), (0, Np - N)))
    bg = jnp.pad(b_gate.astype(jnp.float32), (0, Np - N))
    bx = jnp.pad(b_xform.astype(jnp.float32), (0, Np - N))

    # Per N-tile j, columns [Wg_tile_j | Wx_tile_j] (matches acc[:, :tn]/[:, tn:]).
    w_cat = jnp.stack(
        [wg.reshape(Kp, nb, tn), wx.reshape(Kp, nb, tn)], axis=2
    ).reshape(Kp, 2 * Np)
    b_cat = jnp.stack(
        [bg.reshape(nb, tn), bx.reshape(nb, tn)], axis=1
    ).reshape(1, 2 * Np)

    w_cat = jax.block_until_ready(w_cat)   # materialize the repack at setup time
    b_cat = jax.block_until_ready(b_cat)

    return dict(
        w_cat=w_cat, b_cat=b_cat, N=N, K=K, Np=Np, Kp=Kp,
        tn=tn, tk=tk, tm_default=tm_default,
        vmem_bytes=vmem, num_cores=cores, compute_dtype=cd,
    )


# --------------------------------------------------------------------------
# Forward pass
# --------------------------------------------------------------------------
def swiglu(x, params, *, out_dtype=None):
    """x: (M, K). Returns silu(x @ Wg + bg) * (x @ Wx + bx), shape (M, N)."""
    M, K = x.shape
    assert K == params["K"], f"expected K={params['K']}, got {K}"
    out_dtype = out_dtype or x.dtype
    cd = params["compute_dtype"]
    tn, tk = params["tn"], params["tk"]
    Np, Kp, N = params["Np"], params["Kp"], params["N"]

    tm = min(params["tm_default"], _round_up(M, 8))
    Mp = _round_up(M, tm)

    xp = jnp.pad(x.astype(cd), ((0, Mp - M), (0, Kp - K)))

    grid = (Mp // tm, Np // tn, Kp // tk)

    # ---- VMEM budget: double-buffered tiles + f32 accumulator ----
    in_b = jnp.dtype(cd).itemsize
    out_b = jnp.dtype(out_dtype).itemsize
    resident = (2 * (tm * tk * in_b            # x tile
                     + tk * 2 * tn * in_b      # fused weight tile
                     + 2 * tn * 4              # fused bias tile
                     + tm * tn * out_b)        # out tile
                + tm * 2 * tn * 4)             # f32 accumulator scratch
    cap = int(0.75 * params["vmem_bytes"])     # leave Mosaic scratch headroom
    vmem_limit = int(min(max(int(1.25 * resident), 32 * 1024 * 1024), cap))

    cost = pl.CostEstimate(
        flops=2 * Mp * (2 * Np) * Kp + 4 * Mp * Np,
        transcendentals=Mp * Np,
        bytes_accessed=(xp.size * in_b + params["w_cat"].size * in_b
                        + params["b_cat"].size * 4 + Mp * Np * out_b),
    )

    out = pl.pallas_call(
        swiglu_kernel,
        out_shape=jax.ShapeDtypeStruct((Mp, Np), out_dtype),
        grid_spec=pltpu.PrefetchScalarGridSpec(
            num_scalar_prefetch=0,
            grid=grid,
            in_specs=[
                pl.BlockSpec((tm, tk), lambda i, j, k: (i, k)),       # x tile
                pl.BlockSpec((tk, 2 * tn), lambda i, j, k: (k, j)),   # [Wg|Wx] tile
                pl.BlockSpec((1, 2 * tn), lambda i, j, k: (0, j)),    # [bg|bx] tile
            ],
            out_specs=pl.BlockSpec((tm, tn), lambda i, j, k: (i, j)),
            scratch_shapes=[pltpu.VMEM((tm, 2 * tn), jnp.float32)],
        ),
        compiler_params=pltpu.CompilerParams(
            dimension_semantics=("parallel", "parallel", "arbitrary"),
            vmem_limit_bytes=vmem_limit,
        ),
        cost_estimate=cost,
    )(xp, params["w_cat"], params["b_cat"])

    return out[:M, :N]


if __name__ == "__main__":
    # Small shapes consistent with the module: batch of tokens x hidden.
    batch, size_in, size_out = 8, 32, 32

    key = jax.random.PRNGKey(0)
    kx, kwg, kbg, kwx, kbx = jax.random.split(key, 5)

    x = jax.random.normal(kx, (batch, size_in), dtype=jnp.float32)

    # PyTorch nn.Linear-like uniform init; weights stored transposed (K, N).
    bound = 1.0 / (size_in ** 0.5)
    w_gate = jax.random.uniform(kwg, (size_in, size_out), jnp.float32, -bound, bound)
    b_gate = jax.random.uniform(kbg, (size_out,), jnp.float32, -bound, bound)
    w_xform = jax.random.uniform(kwx, (size_in, size_out), jnp.float32, -bound, bound)
    b_xform = jax.random.uniform(kbx, (size_out,), jnp.float32, -bound, bound)

    # One-time parameter setup (pad + bf16 cast + [Wg|Wx] fusion), then apply.
    params = prepare_swiglu(w_gate, b_gate, w_xform, b_xform)
    out = swiglu(x, params)
    out = jax.block_until_ready(out)

    # Pure-JAX reference with operands rounded to bf16 (matches the kernel's
    # MXU input precision; accumulation/bias/activation in f32 on both sides).
    xb = x.astype(jnp.bfloat16).astype(jnp.float32)
    wgb = w_gate.astype(jnp.bfloat16).astype(jnp.float32)
    wxb = w_xform.astype(jnp.bfloat16).astype(jnp.float32)
    g_ref = xb @ wgb + b_gate
    ref = (g_ref * jax.nn.sigmoid(g_ref)) * (xb @ wxb + b_xform)

    assert out.shape == (batch, size_out)
    assert jnp.allclose(out, ref, atol=2e-3, rtol=2e-3), "mismatch vs reference"

    print("KERNEL_OK")
</pallas_src>

<mosaic_0001>
module attributes {stable_mosaic.version = 11 : i64} {
  func.func @swiglu_kernel(%arg0: i32, %arg1: i32, %arg2: i32, %arg3: memref<8x128xbf16, #tpu.memory_space<vmem>>, %arg4: memref<128x256xbf16, #tpu.memory_space<vmem>>, %arg5: memref<1x256xf32, #tpu.memory_space<vmem>>, %arg6: memref<8x128xf32, #tpu.memory_space<vmem>>, %arg7: memref<8x256xf32, #tpu.memory_space<vmem>>) attributes {dimension_semantics = [#tpu.dimension_semantics<parallel>, #tpu.dimension_semantics<parallel>, #tpu.dimension_semantics<arbitrary>], iteration_bounds = array<i64: 1, 1, 1>, scalar_prefetch = 0 : i64, scratch_operands = 1 : i64, tpu.core_type = #tpu.core_type<tc>, window_params = [{transform_indices = @transform_0, window_bounds = array<i64: 8, 128>}, {transform_indices = @transform_1, window_bounds = array<i64: 128, 256>}, {transform_indices = @transform_2, window_bounds = array<i64: 1, 256>}, {transform_indices = @transform_3, window_bounds = array<i64: 8, 128>}]} {
    %c0 = arith.constant 0 : index
    %c0_0 = arith.constant 0 : index
    %0 = vector.load %arg3[%c0, %c0_0] : memref<8x128xbf16, #tpu.memory_space<vmem>>, vector<8x128xbf16>
    %c0_1 = arith.constant 0 : index
    %c0_2 = arith.constant 0 : index
    %1 = vector.load %arg4[%c0_1, %c0_2] : memref<128x256xbf16, #tpu.memory_space<vmem>>, vector<128x256xbf16>
    %cst = arith.constant dense<0.000000e+00> : vector<8x256xf32>
    %2 = tpu.matmul %0, %1, %cst {dimension_numbers = #tpu.dot_dimension_numbers<[1], [0], [0], [1], [0, 0, 1, 1], [], []>} : vector<8x128xbf16>, vector<128x256xbf16>, vector<8x256xf32> -> vector<8x256xf32>
    %c0_i32 = arith.constant 0 : i32
    %3 = arith.cmpi eq, %arg2, %c0_i32 : i32
    %4 = arith.extui %3 : i1 to i32
    %c0_i32_3 = arith.constant 0 : i32
    %5 = arith.cmpi ne, %4, %c0_i32_3 : i32
    scf.if %5 {
      %c0_8 = arith.constant 0 : index
      %c0_9 = arith.constant 0 : index
      %12 = vector.load %arg7[%c0_8, %c0_9] : memref<8x256xf32, #tpu.memory_space<vmem>>, vector<8x256xf32>
      tpu.vector_store %arg7[%c0_8, %c0_9], %2 {strides = array<i32>} : memref<8x256xf32, #tpu.memory_space<vmem>>, vector<8x256xf32>,
    } else {
    }
    %c0_i32_4 = arith.constant 0 : i32
    %6 = arith.cmpi sgt, %arg2, %c0_i32_4 : i32
    %7 = arith.extui %6 : i1 to i32
    %c0_i32_5 = arith.constant 0 : i32
    %8 = arith.cmpi ne, %7, %c0_i32_5 : i32
    scf.if %8 {
      %c0_8 = arith.constant 0 : index
      %c0_9 = arith.constant 0 : index
      %12 = vector.load %arg7[%c0_8, %c0_9] : memref<8x256xf32, #tpu.memory_space<vmem>>, vector<8x256xf32>
      %13 = arith.addf %12, %2 : vector<8x256xf32>
      %c0_10 = arith.constant 0 : index
      %c0_11 = arith.constant 0 : index
      %14 = vector.load %arg7[%c0_10, %c0_11] : memref<8x256xf32, #tpu.memory_space<vmem>>, vector<8x256xf32>
      tpu.vector_store %arg7[%c0_10, %c0_11], %13 {strides = array<i32>} : memref<8x256xf32, #tpu.memory_space<vmem>>, vector<8x256xf32>,
    } else {
    }
    %c0_i32_6 = arith.constant 0 : i32
    %9 = arith.cmpi eq, %arg2, %c0_i32_6 : i32
    %10 = arith.extui %9 : i1 to i32
    %c0_i32_7 = arith.constant 0 : i32
    %11 = arith.cmpi ne, %10, %c0_i32_7 : i32
    scf.if %11 {
      %c0_8 = arith.constant 0 : index
      %c0_9 = arith.constant 0 : index
      %12 = vector.load %arg7[%c0_8, %c0_9] : memref<8x256xf32, #tpu.memory_space<vmem>>, vector<8x256xf32>
      %c0_10 = arith.constant 0 : index
      %c0_11 = arith.constant 0 : index
      %13 = vector.load %arg5[%c0_10, %c0_11] : memref<1x256xf32, #tpu.memory_space<vmem>>, vector<1x256xf32>
      %14 = vector.broadcast %13 : vector<1x256xf32> to vector<8x256xf32>
      %15 = arith.addf %12, %14 : vector<8x256xf32>
      %16 = vector.extract_strided_slice %15 {offsets = [0, 0], sizes = [8, 128], strides = [1, 1]} : vector<8x256xf32> to vector<8x128xf32>
      %17 = vector.extract_strided_slice %15 {offsets = [0, 128], sizes = [8, 128], strides = [1, 1]} : vector<8x256xf32> to vector<8x128xf32>
      %18 = arith.negf %16 : vector<8x128xf32>
      %19 = math.exp %18 : vector<8x128xf32>
      %cst_12 = arith.constant 1.000000e+00 : f32
      %20 = vector.broadcast %cst_12 : f32 to vector<8x128xf32>
      %21 = arith.addf %20, %19 : vector<8x128xf32>
      %22 = arith.divf %20, %21 : vector<8x128xf32>
      %23 = arith.mulf %16, %22 : vector<8x128xf32>
      %24 = arith.mulf %23, %17 : vector<8x128xf32>
      %c0_13 = arith.constant 0 : index
      %c0_14 = arith.constant 0 : index
      %25 = vector.load %arg6[%c0_13, %c0_14] : memref<8x128xf32, #tpu.memory_space<vmem>>, vector<8x128xf32>
      tpu.vector_store %arg6[%c0_13, %c0_14], %24 {strides = array<i32>} : memref<8x128xf32, #tpu.memory_space<vmem>>, vector<8x128xf32>,
    } else {
    }
    return
  }
  func.func @transform_0(%arg0: i32, %arg1: i32, %arg2: i32) -> (i32, i32) {
    %c0_i32 = arith.constant 0 : i32
    return %arg0, %arg2 : i32, i32
  }
  func.func @transform_1(%arg0: i32, %arg1: i32, %arg2: i32) -> (i32, i32) {
    %c0_i32 = arith.constant 0 : i32
    return %arg2, %arg1 : i32, i32
  }
  func.func @transform_2(%arg0: i32, %arg1: i32, %arg2: i32) -> (i32, i32) {
    %c0_i32 = arith.constant 0 : i32
    %c0_i32_0 = arith.constant 0 : i32
    return %c0_i32, %arg1 : i32, i32
  }
  func.func @transform_3(%arg0: i32, %arg1: i32, %arg2: i32) -> (i32, i32) {
    %c0_i32 = arith.constant 0 : i32
    return %arg0, %arg1 : i32, i32
  }
}

</mosaic_0001>

<llo_original>
// kernel: tpu_custom_call.1
$region0: #{tpu_custom_call.1}
  #allocation0 [shape = 'u32[]', space=smem, size = 0x4, offset = 0x4, fixed_abs, tag = 'smem constant byte address 0x4 - core index']
  #allocation1 [shape = 'u32[144,128]{1,0:T(1,128)}', space=vmem, size = 0x12000, scoped, tag = 'internal scratch']
  #allocation2 [shape = 'f32[8,256]{1,0:T(8,128)}', space=vmem, size = 0x2000, scoped, tag = 'scratch operand']
  %s0 = inlined_call_operand.hbm [shape: bf16[8,128], index: 0, kind: input, shape index: {}]
  %s1 = inlined_call_operand.hbm [shape: bf16[128,256], index: 1, kind: input, shape index: {}]
  %s2 = inlined_call_operand.vmem [shape: f32[1,256], index: 2, kind: input, shape index: {}]
  %s3 = inlined_call_operand.hbm [shape: f32[8,128], index: 3, kind: output, shape index: {}]
  %s4 = sld [smem:[#allocation0]]
  $region42: #{tpu_custom_call.1} parent=0
    _
  %s6 = ssub.s32 1, %s4
  %s7 = scalar_select 0, %s6, %s4
  $region1: #{tpu_custom_call.1} parent=0
    #allocation3 [shape = 'u8[2048]{0}', space=vmem, size = 0x800, scoped, tag = 'input window, operand 0, single buffered']
    #allocation4 [shape = 's32[1]{0}', space=sflag, size = 0x4, scoped, tag = 'scoped memory for tpu_custom_call.1']
    #allocation5 [shape = 's32[1]{0}', space=sflag, size = 0x4, scoped, tag = 'scoped memory for tpu_custom_call.1']
    #allocation6 [shape = 'u8[65536]{0}', space=vmem, size = 0x10000, scoped, tag = 'input window, operand 1, single buffered']
    #allocation7 [shape = 's32[1]{0}', space=sflag, size = 0x4, scoped, tag = 'scoped memory for tpu_custom_call.1']
    #allocation8 [shape = 'u8[4096]{0}', space=vmem, size = 0x1000, scoped, tag = 'output window, operand 0, single buffered']
    %8 = vsyncpa [#allocation4], 0
    %9 = vsyncpa [#allocation7], 0
    %10 = vsyncpa [#allocation5], 0
    // Predicated region
    $region2: #{tpu_custom_call.1} parent=1 // pred_check
      _
    $region3: #{tpu_custom_call.1} parent=1 // pred_check_branch
      %12 = sbr.rel (0) target = $region5
    $region4: #{tpu_custom_call.1} parent=1 // pred_region
      %s14 = ssub.s32 64, 64
      %15 = vsyncadd [#allocation4], %s14
      %s17 = sshll.u32 [#allocation3], 4
      %s18 = int_to_ptr.vmem [resolvable:$true] %s17
      %20 = dma.hbm_to_vmem [thread:$0]  %s0, 64, %s18, [#allocation4]
    $region5: #{tpu_custom_call.1} parent=1 // pred_fallthru
      _
    // Predicated region
    $region6: #{tpu_custom_call.1} parent=1 // pred_check
      _
    $region7: #{tpu_custom_call.1} parent=1 // pred_check_branch
      %22 = sbr.rel (0) target = $region9
    $region8: #{tpu_custom_call.1} parent=1 // pred_region
      %s24 = ssub.s32 2048, 2048
      %25 = vsyncadd [#allocation7], %s24
      %s26 = sshll.u32 [#allocation6], 4
      %s27 = int_to_ptr.vmem [resolvable:$true] %s26
      %32 = dma.hbm_to_vmem [thread:$0]  %s1, 2048, %s27, [#allocation7], 128, 128, 8
    $region9: #{tpu_custom_call.1} parent=1 // pred_fallthru
      _
    // Predicated region
    $region10: #{tpu_custom_call.1} parent=1 // pred_check
      _
    $region11: #{tpu_custom_call.1} parent=1 // pred_check_branch
      %34 = sbr.rel (0) target = $region13
    $region12: #{tpu_custom_call.1} parent=1 // pred_region
      _
    $region13: #{tpu_custom_call.1} parent=1 // pred_fallthru
      _
    // Predicated region
    $region14: #{tpu_custom_call.1} parent=1 // pred_check
      _
    $region15: #{tpu_custom_call.1} parent=1 // pred_check_branch
      %36 = sbr.rel (0) target = $region17
    $region16: #{tpu_custom_call.1} parent=1 // pred_region
      %37 = dma.done [#allocation4], 64
    $region17: #{tpu_custom_call.1} parent=1 // pred_fallthru
      _
    // Predicated region
    $region18: #{tpu_custom_call.1} parent=1 // pred_check
      _
    $region19: #{tpu_custom_call.1} parent=1 // pred_check_branch
      %39 = sbr.rel (0) target = $region21
    $region20: #{tpu_custom_call.1} parent=1 // pred_region
      %40 = dma.done [#allocation7], 2048
    $region21: #{tpu_custom_call.1} parent=1 // pred_fallthru
      _
    %v42 = vld [vmem:[#allocation3] sm:$0xf]
    %v43 = vld [vmem:[#allocation6] sm:$0xff]
    %v44 = vld [vmem:[#allocation6 + $0x8] sm:$0xff]
    %v45 = vld [vmem:[#allocation6 + $0x10] sm:$0xff]
    %v46 = vld [vmem:[#allocation6 + $0x18] sm:$0xff]
    %v47 = vld [vmem:[#allocation6 + $0x20] sm:$0xff]
    %v48 = vld [vmem:[#allocation6 + $0x28] sm:$0xff]
    %v49 = vld [vmem:[#allocation6 + $0x30] sm:$0xff]
    %v50 = vld [vmem:[#allocation6 + $0x38] sm:$0xff]
    %v51 = vld [vmem:[#allocation6 + $0x40] sm:$0xff]
    %v52 = vld [vmem:[#allocation6 + $0x48] sm:$0xff]
    %v53 = vld [vmem:[#allocation6 + $0x50] sm:$0xff]
    %v54 = vld [vmem:[#allocation6 + $0x58] sm:$0xff]
    %v55 = vld [vmem:[#allocation6 + $0x60] sm:$0xff]
    %v56 = vld [vmem:[#allocation6 + $0x68] sm:$0xff]
    %v57 = vld [vmem:[#allocation6 + $0x70] sm:$0xff]
    %v58 = vld [vmem:[#allocation6 + $0x78] sm:$0xff]
    %v75 = vunpack.c.l.b16 %v43
    %v76 = vunpack.c.h.b16 %v43
    %v77 = vunpack.c.l.b16 %v44
    %v78 = vunpack.c.h.b16 %v44
    %v79 = vunpack.c.l.b16 %v45
    %v80 = vunpack.c.h.b16 %v45
    %v81 = vunpack.c.l.b16 %v46
    %v82 = vunpack.c.h.b16 %v46
    %v83 = vunpack.c.l.b16 %v47
    %v84 = vunpack.c.h.b16 %v47
    %v85 = vunpack.c.l.b16 %v48
    %v86 = vunpack.c.h.b16 %v48
    %v87 = vunpack.c.l.b16 %v49
    %v88 = vunpack.c.h.b16 %v49
    %v89 = vunpack.c.l.b16 %v50
    %v90 = vunpack.c.h.b16 %v50
    %v91 = vunpack.c.l.b16 %v51
    %v92 = vunpack.c.h.b16 %v51
    %v93 = vunpack.c.l.b16 %v52
    %v94 = vunpack.c.h.b16 %v52
    %v95 = vunpack.c.l.b16 %v53
    %v96 = vunpack.c.h.b16 %v53
    %v97 = vunpack.c.l.b16 %v54
    %v98 = vunpack.c.h.b16 %v54
    %v99 = vunpack.c.l.b16 %v55
    %v100 = vunpack.c.h.b16 %v55
    %v101 = vunpack.c.l.b16 %v56
    %v102 = vunpack.c.h.b16 %v56
    %v103 = vunpack.c.l.b16 %v57
    %v104 = vunpack.c.h.b16 %v57
    %v105 = vunpack.c.l.b16 %v58
    %v106 = vunpack.c.h.b16 %v58
    %v107 = vpack.c.b16 %v77, %v75
    %v108 = vpack.c.b16 %v78, %v76
    %v109 = vpack.c.b16 %v81, %v79
    %v110 = vpack.c.b16 %v82, %v80
    %v111 = vpack.c.b16 %v85, %v83
    %v112 = vpack.c.b16 %v86, %v84
    %v113 = vpack.c.b16 %v89, %v87
    %v114 = vpack.c.b16 %v90, %v88
    %v115 = vpack.c.b16 %v93, %v91
    %v116 = vpack.c.b16 %v94, %v92
    %v117 = vpack.c.b16 %v97, %v95
    %v118 = vpack.c.b16 %v98, %v96
    %v119 = vpack.c.b16 %v101, %v99
    %v120 = vpack.c.b16 %v102, %v100
    %v121 = vpack.c.b16 %v105, %v103
    %v122 = vpack.c.b16 %v106, %v104
    %139 = vmatprep.subr.bf16.mxu0 %v108
    %140 = vmatpush1.bf16.msra.mxu0 %v107
    %141 = vmatprep.subr.bf16.mxu0 %v110
    %142 = vmatpush1.bf16.msra.mxu0 %v109
    %143 = vmatprep.subr.bf16.mxu0 %v112
    %144 = vmatpush1.bf16.msra.mxu0 %v111
    %145 = vmatprep.subr.bf16.mxu0 %v114
    %146 = vmatpush1.bf16.msra.mxu0 %v113
    %147 = vmatprep.subr.bf16.mxu0 %v116
    %148 = vmatpush1.bf16.msra.mxu0 %v115
    %149 = vmatprep.subr.bf16.mxu0 %v118
    %150 = vmatpush1.bf16.msra.mxu0 %v117
    %151 = vmatprep.subr.bf16.mxu0 %v120
    %152 = vmatpush1.bf16.msra.mxu0 %v119
    %153 = vmatprep.subr.bf16.mxu0 %v122
    %154 = vmatpush1.bf16.msra.mxu0 %v121
    %155 = vmatprep.subr.bf16.mxu0 0
    %156 = vmatpush1.bf16.msra.mxu0 0
    %157 = vmatprep.subr.bf16.mxu0 0
    %158 = vmatpush1.bf16.msra.mxu0 0
    %159 = vmatprep.subr.bf16.mxu0 0
    %160 = vmatpush1.bf16.msra.mxu0 0
    %161 = vmatprep.subr.bf16.mxu0 0
    %162 = vmatpush1.bf16.msra.mxu0 0
    %163 = vmatprep.subr.bf16.mxu0 0
    %164 = vmatpush1.bf16.msra.mxu0 0
    %165 = vmatprep.subr.bf16.mxu0 0
    %166 = vmatpush1.bf16.msra.mxu0 0
    %167 = vmatprep.subr.bf16.mxu0 0
    %168 = vmatpush1.bf16.msra.mxu0 0
    %169 = vmatprep.subr.bf16.mxu0 0
    %170 = vmatpush1.bf16.msra.mxu0 0
    %171 = vmatprep.mubr.bf16.mxu0 0
    %172 = vmatmul.mubr.bf16.gmra.mrb[0].mxu0 %v42
    %v173 = vpop.f32.mrb[0].mxu0
    %v174 = vadd.f32 0.0, %v173
    %v175 = vpop.f32.mrb[0].mxu0
    %v176 = vadd.f32 0.0, %v175
    %v177 = vpop.f32.mrb[0].mxu0
    %v178 = vpop.f32.mrb[0].mxu0
    %179 = vdwg.mxu0
    %p180 = scmp.eq.s32.totalorder 0, 0
    // Predicated region
    $region22: #{tpu_custom_call.1} parent=1 // pred_check
      %p181 = pneg %p180
    $region23: #{tpu_custom_call.1} parent=1 // pred_check_branch
      %183 = sbr.rel (%p181) target = $region25
    $region24: #{tpu_custom_call.1} parent=1 // pred_region
      %184 = vst [vmem:[#allocation2] sm:$0xff] %v174
      %185 = vst [vmem:[#allocation2 + $0x8] sm:$0xff] %v176
    $region25: #{tpu_custom_call.1} parent=1 // pred_fallthru
      _
    %p186 = scmp.gt.s32.totalorder 0, 0
    // Predicated region
    $region26: #{tpu_custom_call.1} parent=1 // pred_check
      %p187 = pneg %p186
    $region27: #{tpu_custom_call.1} parent=1 // pred_check_branch
      %189 = sbr.rel (%p187) target = $region29
    $region28: #{tpu_custom_call.1} parent=1 // pred_region
      %v190 = vld [vmem:[#allocation2] sm:$0xff]
      %v191 = vld [vmem:[#allocation2 + $0x8] sm:$0xff]
      %v192 = vadd.f32 %v190, %v174
      %v193 = vadd.f32 %v191, %v176
      %194 = vst [vmem:[#allocation2] sm:$0xff] %v192
      %195 = vst [vmem:[#allocation2 + $0x8] sm:$0xff] %v193
    $region29: #{tpu_custom_call.1} parent=1 // pred_fallthru
      _
    // Predicated region
    $region30: #{tpu_custom_call.1} parent=1 // pred_check
      %p196 = pneg %p180
    $region31: #{tpu_custom_call.1} parent=1 // pred_check_branch
      %198 = sbr.rel (%p196) target = $region33
    $region32: #{tpu_custom_call.1} parent=1 // pred_region
      %v199 = vld [vmem:[#allocation2] sm:$0xff]
      %v200 = vld [vmem:[#allocation2 + $0x8] sm:$0xff]
      %v201 = vld [vmem:[%s2] sm:$0x3]
      %v203 = vlaneseq
      %v204 = vshrl.u32 %v203, 7
      %v205 = vsub.s32 0, %v204
      %v206 = vrot.slane %v201, %v205
      %v207 = vlaneseq
      %v208 = vshrl.u32 %v207, 7
      %v209 = vsub.s32 1, %v208
      %v210 = vrot.slane %v201, %v209
      %v213 = vadd.f32 %v199, %v206
      %v214 = vadd.f32 %v200, %v210
      %v215 = vxor.u32 %v213, 2147483648
      %v216 = vmul.f32 %v215, 1.442695
      %v217 = vpow.pop %v216
      %v218 = vadd.f32 %v217, 1.0
      %v219 = vrcp.pop %v218
      %v220 = vmul.f32 1.0, %v219
      %v221 = vmul.f32 %v213, %v220
      %v222 = vmul.f32 %v221, %v214
      %223 = vst [vmem:[#allocation8] sm:$0xff] %v222
    $region33: #{tpu_custom_call.1} parent=1 // pred_fallthru
      _
    // Predicated region
    $region34: #{tpu_custom_call.1} parent=1 // pred_check
      _
    $region35: #{tpu_custom_call.1} parent=1 // pred_check_branch
      %225 = sbr.rel (0) target = $region37
    $region36: #{tpu_custom_call.1} parent=1 // pred_region
      %s227 = ssub.s32 128, 128
      %228 = vsyncadd [#allocation5], %s227
      %s230 = sshll.u32 [#allocation8], 4
      %s231 = int_to_ptr.vmem [resolvable:$true] %s230
      %233 = dma.vmem_to_hbm [thread:$0]  %s231, 128, %s3, [#allocation5]
    $region37: #{tpu_custom_call.1} parent=1 // pred_fallthru
      _
    // Predicated region
    $region38: #{tpu_custom_call.1} parent=1 // pred_check
      _
    $region39: #{tpu_custom_call.1} parent=1 // pred_check_branch
      %235 = sbr.rel (0) target = $region41
    $region40: #{tpu_custom_call.1} parent=1 // pred_region
      %236 = dma.done [#allocation5], 128
    $region41: #{tpu_custom_call.1} parent=1 // pred_fallthru
      _
    %237 = vsyncpa [#allocation4], 1
    %238 = vsyncpa [#allocation7], 1
    %239 = vsyncpa [#allocation5], 1

</llo_original>
